<compile_context>
chip_gen: v7x
topology: tpu7x:2x2x1
jax: 0.10.0
libtpu: 0.0.40
codegen_flags: <defaults>
</compile_context>

<pallas_src>
import jax
import jax.numpy as jnp
from jax.experimental import pallas as pl
from jax.experimental.pallas import tpu as pltpu


def _round_up(x, m):
    return ((x + m - 1) // m) * m


def _sublane_multiple(dtype):
    # f32 -> 8, bf16 -> 16, int8/fp8 -> 32 (keeps vregs fully packed).
    return max(8, 32 // jnp.dtype(dtype).itemsize)


def _device_defaults():
    """Generation-aware defaults: (tm, tn, vmem_limit_bytes, n_row_cores)."""
    try:
        kind = jax.devices()[0].device_kind.lower()
    except Exception:
        kind = ""
    if "v7" in kind:
        # 64 MiB physical VMEM per TC, 2 TCs/chip -> conservative budget.
        return 512, 512, 48 * 1024 * 1024, 2
    if "v6" in kind:
        return 1024, 1024, 100 * 1024 * 1024, 1
    if "v5" in kind:
        return 1024, 1024, 96 * 1024 * 1024, 1
    # Unknown generation: conservative, fits a 64 MiB part.
    return 512, 512, 48 * 1024 * 1024, 1


def _vmem_bytes(tm, tn, d_pad, itemsize):
    # Double-buffered inputs & output tiles + f32 accumulator
    # (biases pad to 8 sublanes in VMEM).
    dbl = 2 * itemsize * (tm * d_pad      # x row tile
                          + d_pad * tn    # W1 chunk
                          + 8 * tn        # b1 chunk
                          + tn * d_pad    # W2 chunk
                          + 8 * d_pad     # b2
                          + tm * d_pad)   # out tile
    return dbl + 4 * tm * d_pad           # f32 accumulator


def ffn_kernel(x_ref, w1_ref, b1_ref, w2_ref, b2_ref, o_ref, acc_ref):
    j = pl.program_id(1)

    # Linear 1 (chunk of hidden dim): [tm, D] @ [D, tn] -> [tm, tn], f32 MXU acc.
    h = jnp.dot(x_ref[...], w1_ref[...], preferred_element_type=jnp.float32)
    h = h + b1_ref[...].astype(jnp.float32)

    # Mish in f32 with a single transcendental (EUP):
    #   mish(h) = h * tanh(softplus(h)) = h * (t^2 + 2t) / (t^2 + 2t + 2), t = e^h
    # with PyTorch's softplus threshold=20 passthrough (also keeps t^2 finite).
    t = jnp.exp(jnp.minimum(h, 20.0))
    num = t * (t + 2.0)
    m = jnp.where(h > 20.0, h, h * (num / (num + 2.0)))

    # Linear 2, partial over this hidden chunk: [tm, tn] @ [tn, D] -> [tm, D].
    partial = jnp.dot(m.astype(w2_ref.dtype), w2_ref[...],
                      preferred_element_type=jnp.float32)

    @pl.when(j == 0)
    def _first():
        # Plain assign on the first chunk: no zero-fill store + re-read of zeros.
        acc_ref[...] = partial

    @pl.when(j > 0)
    def _accumulate():
        acc_ref[...] += partial

    @pl.when(j == pl.num_programs(1) - 1)
    def _finalize():
        # TODO(synk): nn.Dropout is identity at inference; training-mode dropout
        # (pltpu.prng_seed / prng_random_bits + inverse scale) is not implemented.
        o_ref[...] = (acc_ref[...] + b2_ref[...].astype(jnp.float32)).astype(o_ref.dtype)


def feed_forward(x, w1, b1, w2, b2, *, tm=None, tn=None, vmem_limit_bytes=None,
                 compute_dtype=None):
    """x: [B, T, D]; w1: [D, H]; b1: [H]; w2: [H, D]; b2: [D] with H = 4*D.

    Weights are stored (in, out): the kernel computes x @ W (equivalent to
    PyTorch's x @ W.T with W of shape (out, in)).
    compute_dtype: optionally cast x/W1/W2 (e.g. jnp.bfloat16) once before the
    MXU; accumulation stays f32 and the output keeps x's original dtype.
    """
    B, T, D = x.shape
    H = w1.shape[1]
    M = B * T
    out_dtype = x.dtype

    tm_d, tn_d, vmem_d, n_row_cores = _device_defaults()
    tm = tm_d if tm is None else tm
    tn = tn_d if tn is None else tn
    vmem_limit_bytes = vmem_d if vmem_limit_bytes is None else vmem_limit_bytes

    if compute_dtype is not None:
        x = x.astype(compute_dtype)
        w1 = w1.astype(compute_dtype)
        w2 = w2.astype(compute_dtype)
    in_dtype = x.dtype
    itemsize = jnp.dtype(in_dtype).itemsize
    sub = _sublane_multiple(in_dtype)

    # Lane-dense padding of feature dims (zero padding is exact for this FFN).
    D_pad = _round_up(D, 128)
    H_pad = _round_up(H, 128)

    # Row tile: clip to problem, round to the dtype sublane multiple.
    tm_eff = _round_up(min(tm, _round_up(M, sub)), sub)
    # On 2-TC parts (v7x) keep >= 2 row tiles when possible so the "parallel"
    # row axis can be sharded across cores.
    if n_row_cores > 1 and M > sub:
        tm_eff = min(tm_eff, _round_up((M + n_row_cores - 1) // n_row_cores, sub))

    def pick_tn(cap):
        cap = max(128, (cap // 128) * 128)
        for cand in range(min(cap, H_pad), 127, -128):
            if H_pad % cand == 0:
                return cand
        return 128

    tn_eff = pick_tn(tn)

    # Fit tiles into the generation-aware VMEM budget.
    while _vmem_bytes(tm_eff, tn_eff, D_pad, itemsize) > vmem_limit_bytes and tm_eff > sub:
        tm_eff = max(sub, _round_up(tm_eff // 2, sub))
    while _vmem_bytes(tm_eff, tn_eff, D_pad, itemsize) > vmem_limit_bytes and tn_eff > 128:
        tn_eff = pick_tn(max(128, tn_eff // 2))

    M_pad = _round_up(M, tm_eff)

    x2 = jnp.pad(x.reshape(M, D), ((0, M_pad - M), (0, D_pad - D)))
    # NOTE: W1's hidden chunk is a column slice of row-major [D, H]; tn >= 512 by
    # default keeps each strided DMA segment >= 1 KiB.  Pre-transposing W1 to
    # [H_pad, D_pad] is an option if profiling shows exposed weight DMA.
    w1p = jnp.pad(w1, ((0, D_pad - D), (0, H_pad - H)))
    b1p = jnp.pad(b1, (0, H_pad - H)).reshape(1, H_pad)
    w2p = jnp.pad(w2, ((0, H_pad - H), (0, D_pad - D)))
    b2p = jnp.pad(b2, (0, D_pad - D)).reshape(1, D_pad)

    grid = (M_pad // tm_eff, H_pad // tn_eff)

    cost = pl.CostEstimate(
        flops=4 * M_pad * D_pad * H_pad,            # 2 matmuls, 2 flops/MAC
        transcendentals=M_pad * H_pad,              # one exp per hidden element
        bytes_accessed=itemsize * (2 * M_pad * D_pad + 2 * D_pad * H_pad + H_pad + D_pad),
    )

    out = pl.pallas_call(
        ffn_kernel,
        out_shape=jax.ShapeDtypeStruct((M_pad, D_pad), out_dtype),
        grid_spec=pltpu.PrefetchScalarGridSpec(
            num_scalar_prefetch=0,
            grid=grid,
            in_specs=[
                pl.BlockSpec((tm_eff, D_pad), lambda i, j: (i, 0)),   # x row tile (resident over j)
                pl.BlockSpec((D_pad, tn_eff), lambda i, j: (0, j)),   # W1 hidden chunk
                pl.BlockSpec((1, tn_eff), lambda i, j: (0, j)),       # b1 chunk
                pl.BlockSpec((tn_eff, D_pad), lambda i, j: (j, 0)),   # W2 hidden chunk
                pl.BlockSpec((1, D_pad), lambda i, j: (0, 0)),        # b2
            ],
            out_specs=pl.BlockSpec((tm_eff, D_pad), lambda i, j: (i, 0)),
            scratch_shapes=[pltpu.VMEM((tm_eff, D_pad), jnp.float32)],
        ),
        compiler_params=pltpu.CompilerParams(
            dimension_semantics=("parallel", "arbitrary"),
            vmem_limit_bytes=vmem_limit_bytes,
        ),
        cost_estimate=cost,
    )(x2, w1p, b1p, w2p, b2p)

    return out[:M, :D].reshape(B, T, D)


def _reference(x, w1, b1, w2, b2):
    xf = x.astype(jnp.float32)
    h = xf @ w1.astype(jnp.float32) + b1.astype(jnp.float32)
    sp = jnp.where(h > 20.0, h, jnp.log1p(jnp.exp(jnp.minimum(h, 20.0))))
    m = h * jnp.tanh(sp)
    return m @ w2.astype(jnp.float32) + b2.astype(jnp.float32)


def _make_params(key, B, T, D, dtype=jnp.float32):
    H = 4 * D
    kx, k1, k2, k3, k4 = jax.random.split(key, 5)
    x = jax.random.normal(kx, (B, T, D), dtype=jnp.float32)
    w1 = jax.random.uniform(k1, (D, H), jnp.float32, -1.0, 1.0) / jnp.sqrt(D)
    b1 = jax.random.uniform(k2, (H,), jnp.float32, -1.0, 1.0) / jnp.sqrt(D)
    w2 = jax.random.uniform(k3, (H, D), jnp.float32, -1.0, 1.0) / jnp.sqrt(H)
    b2 = jax.random.uniform(k4, (D,), jnp.float32, -1.0, 1.0) / jnp.sqrt(H)
    cast = lambda a: a.astype(dtype)
    return tuple(map(cast, (x, w1, b1, w2, b2)))


if __name__ == "__main__":
    key = jax.random.PRNGKey(0)
    k0, k1, k2 = jax.random.split(key, 3)

    # Test 1: base config (n_embd=32, hidden=128), f32, single hidden chunk.
    x, w1, b1, w2, b2 = _make_params(k0, B=2, T=8, D=32)
    y = feed_forward(x, w1, b1, w2, b2)
    jax.block_until_ready(y)
    y_ref = _reference(x, w1, b1, w2, b2)
    assert y.shape == x.shape
    assert jnp.allclose(y, y_ref, atol=5e-5, rtol=5e-5), "test1 mismatch vs reference"

    # Test 2: shapes needing padding (M=10 rows, D=48 -> padded to 128 lanes).
    x, w1, b1, w2, b2 = _make_params(k1, B=2, T=5, D=48)
    y = feed_forward(x, w1, b1, w2, b2)
    jax.block_until_ready(y)
    y_ref = _reference(x, w1, b1, w2, b2)
    assert jnp.allclose(y, y_ref, atol=5e-5, rtol=5e-5), "test2 mismatch vs reference"

    # Test 3: multiple row tiles and multiple hidden chunks (accumulator path).
    x, w1, b1, w2, b2 = _make_params(k2, B=2, T=8, D=96)
    y = feed_forward(x, w1, b1, w2, b2, tm=8, tn=128)
    jax.block_until_ready(y)
    y_ref = _reference(x, w1, b1, w2, b2)
    assert jnp.allclose(y, y_ref, atol=5e-5, rtol=5e-5), "test3 mismatch vs reference"

    # Test 4: bf16 activations/weights fed straight to the MXU (f32 acc inside).
    x, w1, b1, w2, b2 = _make_params(k0, B=2, T=8, D=32, dtype=jnp.bfloat16)
    y = feed_forward(x, w1, b1, w2, b2)
    jax.block_until_ready(y)
    y_ref = _reference(x, w1, b1, w2, b2)
    assert y.dtype == jnp.bfloat16
    assert jnp.allclose(y.astype(jnp.float32), y_ref, atol=0.1, rtol=0.1), "test4 mismatch vs reference"

    # Test 5: f32 inputs with a one-time wrapper cast to bf16 for the MXU.
    x, w1, b1, w2, b2 = _make_params(k1, B=2, T=8, D=32)
    y = feed_forward(x, w1, b1, w2, b2, compute_dtype=jnp.bfloat16)
    jax.block_until_ready(y)
    y_ref = _reference(x, w1, b1, w2, b2)
    assert y.dtype == jnp.float32
    assert jnp.allclose(y, y_ref, atol=0.1, rtol=0.1), "test5 mismatch vs reference"

    print("KERNEL_OK")
</pallas_src>

<mosaic_0001>
module attributes {stable_mosaic.version = 11 : i64} {
  func.func @ffn_kernel(%arg0: i32, %arg1: i32, %arg2: memref<16x128xf32, #tpu.memory_space<vmem>>, %arg3: memref<128x128xf32, #tpu.memory_space<vmem>>, %arg4: memref<1x128xf32, #tpu.memory_space<vmem>>, %arg5: memref<128x128xf32, #tpu.memory_space<vmem>>, %arg6: memref<1x128xf32, #tpu.memory_space<vmem>>, %arg7: memref<16x128xf32, #tpu.memory_space<vmem>>, %arg8: memref<16x128xf32, #tpu.memory_space<vmem>>) attributes {dimension_semantics = [#tpu.dimension_semantics<parallel>, #tpu.dimension_semantics<arbitrary>], iteration_bounds = array<i64: 1, 1>, scalar_prefetch = 0 : i64, scratch_operands = 1 : i64, tpu.core_type = #tpu.core_type<tc>, window_params = [{transform_indices = @transform_0, window_bounds = array<i64: 16, 128>}, {transform_indices = @transform_1, window_bounds = array<i64: 128, 128>}, {transform_indices = @transform_2, window_bounds = array<i64: 1, 128>}, {transform_indices = @transform_3, window_bounds = array<i64: 128, 128>}, {pipeline_mode = #tpu.pipeline_mode<synchronous>, transform_indices = @transform_4, window_bounds = array<i64: 1, 128>}, {transform_indices = @transform_5, window_bounds = array<i64: 16, 128>}]} {
    %c0 = arith.constant 0 : index
    %c0_0 = arith.constant 0 : index
    %0 = vector.load %arg2[%c0, %c0_0] : memref<16x128xf32, #tpu.memory_space<vmem>>, vector<16x128xf32>
    %c0_1 = arith.constant 0 : index
    %c0_2 = arith.constant 0 : index
    %1 = vector.load %arg3[%c0_1, %c0_2] : memref<128x128xf32, #tpu.memory_space<vmem>>, vector<128x128xf32>
    %cst = arith.constant dense<0.000000e+00> : vector<16x128xf32>
    %2 = tpu.matmul %0, %1, %cst {dimension_numbers = #tpu.dot_dimension_numbers<[1], [0], [0], [1], [0, 0, 1, 1], [], []>} : vector<16x128xf32>, vector<128x128xf32>, vector<16x128xf32> -> vector<16x128xf32>
    %c0_3 = arith.constant 0 : index
    %c0_4 = arith.constant 0 : index
    %3 = vector.load %arg4[%c0_3, %c0_4] : memref<1x128xf32, #tpu.memory_space<vmem>>, vector<1x128xf32>
    %4 = vector.broadcast %3 : vector<1x128xf32> to vector<16x128xf32>
    %5 = arith.addf %2, %4 : vector<16x128xf32>
    %cst_5 = arith.constant 2.000000e+01 : f32
    %6 = vector.broadcast %cst_5 : f32 to vector<16x128xf32>
    %7 = arith.minimumf %5, %6 : vector<16x128xf32>
    %8 = math.exp %7 : vector<16x128xf32>
    %cst_6 = arith.constant 2.000000e+00 : f32
    %9 = vector.broadcast %cst_6 : f32 to vector<16x128xf32>
    %10 = arith.addf %8, %9 : vector<16x128xf32>
    %11 = arith.mulf %8, %10 : vector<16x128xf32>
    %cst_7 = arith.constant 2.000000e+01 : f32
    %12 = vector.broadcast %cst_7 : f32 to vector<16x128xf32>
    %13 = arith.cmpf ogt, %5, %12 : vector<16x128xf32>
    %cst_8 = arith.constant 2.000000e+00 : f32
    %14 = vector.broadcast %cst_8 : f32 to vector<16x128xf32>
    %15 = arith.addf %11, %14 : vector<16x128xf32>
    %16 = arith.divf %11, %15 : vector<16x128xf32>
    %17 = arith.mulf %5, %16 : vector<16x128xf32>
    %18 = arith.select %13, %5, %17 : vector<16x128xi1>, vector<16x128xf32>
    %c0_9 = arith.constant 0 : index
    %c0_10 = arith.constant 0 : index
    %19 = vector.load %arg5[%c0_9, %c0_10] : memref<128x128xf32, #tpu.memory_space<vmem>>, vector<128x128xf32>
    %cst_11 = arith.constant dense<0.000000e+00> : vector<16x128xf32>
    %20 = tpu.matmul %18, %19, %cst_11 {dimension_numbers = #tpu.dot_dimension_numbers<[1], [0], [0], [1], [0, 0, 1, 1], [], []>} : vector<16x128xf32>, vector<128x128xf32>, vector<16x128xf32> -> vector<16x128xf32>
    %c0_i32 = arith.constant 0 : i32
    %21 = arith.cmpi eq, %arg1, %c0_i32 : i32
    %22 = arith.extui %21 : i1 to i32
    %c0_i32_12 = arith.constant 0 : i32
    %23 = arith.cmpi ne, %22, %c0_i32_12 : i32
    scf.if %23 {
      %c0_17 = arith.constant 0 : index
      %c0_18 = arith.constant 0 : index
      %30 = vector.load %arg8[%c0_17, %c0_18] : memref<16x128xf32, #tpu.memory_space<vmem>>, vector<16x128xf32>
      tpu.vector_store %arg8[%c0_17, %c0_18], %20 {strides = array<i32>} : memref<16x128xf32, #tpu.memory_space<vmem>>, vector<16x128xf32>,
    } else {
    }
    %c0_i32_13 = arith.constant 0 : i32
    %24 = arith.cmpi sgt, %arg1, %c0_i32_13 : i32
    %25 = arith.extui %24 : i1 to i32
    %c0_i32_14 = arith.constant 0 : i32
    %26 = arith.cmpi ne, %25, %c0_i32_14 : i32
    scf.if %26 {
      %c0_17 = arith.constant 0 : index
      %c0_18 = arith.constant 0 : index
      %30 = vector.load %arg8[%c0_17, %c0_18] : memref<16x128xf32, #tpu.memory_space<vmem>>, vector<16x128xf32>
      %31 = arith.addf %30, %20 : vector<16x128xf32>
      %c0_19 = arith.constant 0 : index
      %c0_20 = arith.constant 0 : index
      %32 = vector.load %arg8[%c0_19, %c0_20] : memref<16x128xf32, #tpu.memory_space<vmem>>, vector<16x128xf32>
      tpu.vector_store %arg8[%c0_19, %c0_20], %31 {strides = array<i32>} : memref<16x128xf32, #tpu.memory_space<vmem>>, vector<16x128xf32>,
    } else {
    }
    %c0_i32_15 = arith.constant 0 : i32
    %27 = arith.cmpi eq, %arg1, %c0_i32_15 : i32
    %28 = arith.extui %27 : i1 to i32
    %c0_i32_16 = arith.constant 0 : i32
    %29 = arith.cmpi ne, %28, %c0_i32_16 : i32
    scf.if %29 {
      %c0_17 = arith.constant 0 : index
      %c0_18 = arith.constant 0 : index
      %30 = vector.load %arg8[%c0_17, %c0_18] : memref<16x128xf32, #tpu.memory_space<vmem>>, vector<16x128xf32>
      %c0_19 = arith.constant 0 : index
      %c0_20 = arith.constant 0 : index
      %31 = vector.load %arg6[%c0_19, %c0_20] : memref<1x128xf32, #tpu.memory_space<vmem>>, vector<1x128xf32>
      %32 = vector.broadcast %31 : vector<1x128xf32> to vector<16x128xf32>
      %33 = arith.addf %30, %32 : vector<16x128xf32>
      %c0_21 = arith.constant 0 : index
      %c0_22 = arith.constant 0 : index
      %34 = vector.load %arg7[%c0_21, %c0_22] : memref<16x128xf32, #tpu.memory_space<vmem>>, vector<16x128xf32>
      tpu.vector_store %arg7[%c0_21, %c0_22], %33 {strides = array<i32>} : memref<16x128xf32, #tpu.memory_space<vmem>>, vector<16x128xf32>,
    } else {
    }
    return
  }
  func.func @transform_0(%arg0: i32, %arg1: i32) -> (i32, i32) {
    %c0_i32 = arith.constant 0 : i32
    %c0_i32_0 = arith.constant 0 : i32
    return %arg0, %c0_i32 : i32, i32
  }
  func.func @transform_1(%arg0: i32, %arg1: i32) -> (i32, i32) {
    %c0_i32 = arith.constant 0 : i32
    %c0_i32_0 = arith.constant 0 : i32
    return %c0_i32, %arg1 : i32, i32
  }
  func.func @transform_2(%arg0: i32, %arg1: i32) -> (i32, i32) {
    %c0_i32 = arith.constant 0 : i32
    %c0_i32_0 = arith.constant 0 : i32
    return %c0_i32, %arg1 : i32, i32
  }
  func.func @transform_3(%arg0: i32, %arg1: i32) -> (i32, i32) {
    %c0_i32 = arith.constant 0 : i32
    %c0_i32_0 = arith.constant 0 : i32
    return %arg1, %c0_i32 : i32, i32
  }
  func.func @transform_4(%arg0: i32, %arg1: i32) -> (i32, i32) {
    %c0_i32 = arith.constant 0 : i32
    %c0_i32_0 = arith.constant 0 : i32
    %c0_i32_1 = arith.constant 0 : i32
    return %c0_i32, %c0_i32_0 : i32, i32
  }
  func.func @transform_5(%arg0: i32, %arg1: i32) -> (i32, i32) {
    %c0_i32 = arith.constant 0 : i32
    %c0_i32_0 = arith.constant 0 : i32
    return %arg0, %c0_i32 : i32, i32
  }
}

</mosaic_0001>

<llo_original>
// kernel: tpu_custom_call.1
$region0: #{tpu_custom_call.1}
  #allocation0 [shape = 'u32[]', space=smem, size = 0x4, offset = 0x4, fixed_abs, tag = 'smem constant byte address 0x4 - core index']
  #allocation1 [shape = 'u32[144,128]{1,0:T(1,128)}', space=vmem, size = 0x12000, scoped, tag = 'internal scratch']
  #allocation2 [shape = 'f32[16,128]{1,0:T(8,128)}', space=vmem, size = 0x2000, scoped, tag = 'scratch operand']
  %s0 = inlined_call_operand.hbm [shape: f32[16,128], index: 0, kind: input, shape index: {}]
  %s1 = inlined_call_operand.hbm [shape: f32[128,128], index: 1, kind: input, shape index: {}]
  %s2 = inlined_call_operand.vmem [shape: f32[1,128], index: 2, kind: input, shape index: {}]
  %s3 = inlined_call_operand.hbm [shape: f32[128,128], index: 3, kind: input, shape index: {}]
  %s4 = inlined_call_operand.vmem [shape: f32[1,128], index: 4, kind: input, shape index: {}]
  %s5 = inlined_call_operand.hbm [shape: f32[16,128], index: 5, kind: output, shape index: {}]
  %s6 = sld [smem:[#allocation0]]
  $region54: #{tpu_custom_call.1} parent=0
    _
  %s8 = ssub.s32 1, %s6
  %s9 = scalar_select 0, %s8, %s6
  $region1: #{tpu_custom_call.1} parent=0
    #allocation3 [shape = 'u8[8192]{0}', space=vmem, size = 0x2000, scoped, tag = 'input window, operand 0, single buffered']
    #allocation4 [shape = 's32[1]{0}', space=sflag, size = 0x4, scoped, tag = 'scoped memory for tpu_custom_call.1']
    #allocation5 [shape = 's32[1]{0}', space=sflag, size = 0x4, scoped, tag = 'scoped memory for tpu_custom_call.1']
    #allocation6 [shape = 'u8[65536]{0}', space=vmem, size = 0x10000, scoped, tag = 'input window, operand 1, single buffered']
    #allocation7 [shape = 's32[1]{0}', space=sflag, size = 0x4, scoped, tag = 'scoped memory for tpu_custom_call.1']
    #allocation8 [shape = 'u8[65536]{0}', space=vmem, size = 0x10000, scoped, tag = 'input window, operand 3, single buffered']
    #allocation9 [shape = 'u8[8192]{0}', space=vmem, size = 0x2000, scoped, tag = 'output window, operand 0, single buffered']
    %10 = vsyncpa [#allocation4], 0
    %11 = vsyncpa [#allocation7], 0
    %12 = vsyncpa [#allocation5], 0
    // Predicated region
    $region2: #{tpu_custom_call.1} parent=1 // pred_check
      _
    $region3: #{tpu_custom_call.1} parent=1 // pred_check_branch
      %14 = sbr.rel (0) target = $region5
    $region4: #{tpu_custom_call.1} parent=1 // pred_region
      %s16 = ssub.s32 256, 256
      %17 = vsyncadd [#allocation4], %s16
      %s18 = sshll.u32 [#allocation3], 4
      %s19 = int_to_ptr.vmem [resolvable:$true] %s18
      %24 = dma.hbm_to_vmem [thread:$0]  %s0, 256, %s19, [#allocation4], 128, 128, 8
    $region5: #{tpu_custom_call.1} parent=1 // pred_fallthru
      _
    // Predicated region
    $region6: #{tpu_custom_call.1} parent=1 // pred_check
      _
    $region7: #{tpu_custom_call.1} parent=1 // pred_check_branch
      %26 = sbr.rel (0) target = $region9
    $region8: #{tpu_custom_call.1} parent=1 // pred_region
      %s28 = ssub.s32 2048, 2048
      %29 = vsyncadd [#allocation7], %s28
      %s30 = sshll.u32 [#allocation6], 4
      %s31 = int_to_ptr.vmem [resolvable:$true] %s30
      %36 = dma.hbm_to_vmem [thread:$0]  %s1, 2048, %s31, [#allocation7], 128, 128, 8
    $region9: #{tpu_custom_call.1} parent=1 // pred_fallthru
      _
    // Predicated region
    $region10: #{tpu_custom_call.1} parent=1 // pred_check
      _
    $region11: #{tpu_custom_call.1} parent=1 // pred_check_branch
      %38 = sbr.rel (0) target = $region13
    $region12: #{tpu_custom_call.1} parent=1 // pred_region
      _
    $region13: #{tpu_custom_call.1} parent=1 // pred_fallthru
      _
    // Predicated region
    $region14: #{tpu_custom_call.1} parent=1 // pred_check
      _
    $region15: #{tpu_custom_call.1} parent=1 // pred_check_branch
      %40 = sbr.rel (0) target = $region17
    $region16: #{tpu_custom_call.1} parent=1 // pred_region
      %s42 = ssub.s32 2048, 2048
      %43 = vsyncadd [#allocation7], %s42
      %s44 = sshll.u32 [#allocation8], 4
      %s45 = int_to_ptr.vmem [resolvable:$true] %s44
      %50 = dma.hbm_to_vmem [thread:$0]  %s3, 2048, %s45, [#allocation7], 128, 128, 8
    $region17: #{tpu_custom_call.1} parent=1 // pred_fallthru
      _
    // Predicated region
    $region18: #{tpu_custom_call.1} parent=1 // pred_check
      _
    $region19: #{tpu_custom_call.1} parent=1 // pred_check_branch
      %52 = sbr.rel (0) target = $region21
    $region20: #{tpu_custom_call.1} parent=1 // pred_region
      _
    $region21: #{tpu_custom_call.1} parent=1 // pred_fallthru
      _
    // Predicated region
    $region22: #{tpu_custom_call.1} parent=1 // pred_check
      _
    $region23: #{tpu_custom_call.1} parent=1 // pred_check_branch
      %54 = sbr.rel (0) target = $region25
    $region24: #{tpu_custom_call.1} parent=1 // pred_region
      %55 = dma.done [#allocation4], 256
    $region25: #{tpu_custom_call.1} parent=1 // pred_fallthru
      _
    // Predicated region
    $region26: #{tpu_custom_call.1} parent=1 // pred_check
      _
    $region27: #{tpu_custom_call.1} parent=1 // pred_check_branch
      %57 = sbr.rel (0) target = $region29
    $region28: #{tpu_custom_call.1} parent=1 // pred_region
      %58 = dma.done [#allocation7], 2048
    $region29: #{tpu_custom_call.1} parent=1 // pred_fallthru
      _
    // Predicated region
    $region30: #{tpu_custom_call.1} parent=1 // pred_check
      _
    $region31: #{tpu_custom_call.1} parent=1 // pred_check_branch
      %60 = sbr.rel (0) target = $region33
    $region32: #{tpu_custom_call.1} parent=1 // pred_region
      %61 = dma.done [#allocation7], 2048
    $region33: #{tpu_custom_call.1} parent=1 // pred_fallthru
      _
    %v62 = vld [vmem:[#allocation3] sm:$0xff]
    %v63 = vld [vmem:[#allocation3 + $0x8] sm:$0xff]
    %v64 = vld [vmem:[#allocation6] sm:$0xff]
    %v65 = vld [vmem:[#allocation6 + $0x8] sm:$0xff]
    %v66 = vld [vmem:[#allocation6 + $0x10] sm:$0xff]
    %v67 = vld [vmem:[#allocation6 + $0x18] sm:$0xff]
    %v68 = vld [vmem:[#allocation6 + $0x20] sm:$0xff]
    %v69 = vld [vmem:[#allocation6 + $0x28] sm:$0xff]
    %v70 = vld [vmem:[#allocation6 + $0x30] sm:$0xff]
    %v71 = vld [vmem:[#allocation6 + $0x38] sm:$0xff]
    %v72 = vld [vmem:[#allocation6 + $0x40] sm:$0xff]
    %v73 = vld [vmem:[#allocation6 + $0x48] sm:$0xff]
    %v74 = vld [vmem:[#allocation6 + $0x50] sm:$0xff]
    %v75 = vld [vmem:[#allocation6 + $0x58] sm:$0xff]
    %v76 = vld [vmem:[#allocation6 + $0x60] sm:$0xff]
    %v77 = vld [vmem:[#allocation6 + $0x68] sm:$0xff]
    %v78 = vld [vmem:[#allocation6 + $0x70] sm:$0xff]
    %v79 = vld [vmem:[#allocation6 + $0x78] sm:$0xff]
    %v80 = vld [vmem:[%s2] sm:$0x1]
    %v82 = vlaneseq
    %v83 = vshrl.u32 %v82, 7
    %v84 = vsub.s32 0, %v83
    %v85 = vrot.slane %v80, %v84
    %87 = vmatprep.subr.mxu0 0.0
    %88 = vmatpush1.msra.mxu0 %v64
    %89 = vmatprep.subr.mxu0 0.0
    %90 = vmatpush1.msra.mxu0 %v65
    %91 = vmatprep.subr.mxu0 0.0
    %92 = vmatpush1.msra.mxu0 %v66
    %93 = vmatprep.subr.mxu0 0.0
    %94 = vmatpush1.msra.mxu0 %v67
    %95 = vmatprep.subr.mxu0 0.0
    %96 = vmatpush1.msra.mxu0 %v68
    %97 = vmatprep.subr.mxu0 0.0
    %98 = vmatpush1.msra.mxu0 %v69
    %99 = vmatprep.subr.mxu0 0.0
    %100 = vmatpush1.msra.mxu0 %v70
    %101 = vmatprep.subr.mxu0 0.0
    %102 = vmatpush1.msra.mxu0 %v71
    %103 = vmatprep.subr.mxu0 0.0
    %104 = vmatpush1.msra.mxu0 %v72
    %105 = vmatprep.subr.mxu0 0.0
    %106 = vmatpush1.msra.mxu0 %v73
    %107 = vmatprep.subr.mxu0 0.0
    %108 = vmatpush1.msra.mxu0 %v74
    %109 = vmatprep.subr.mxu0 0.0
    %110 = vmatpush1.msra.mxu0 %v75
    %111 = vmatprep.subr.mxu0 0.0
    %112 = vmatpush1.msra.mxu0 %v76
    %113 = vmatprep.subr.mxu0 0.0
    %114 = vmatpush1.msra.mxu0 %v77
    %115 = vmatprep.subr.mxu0 0.0
    %116 = vmatpush1.msra.mxu0 %v78
    %117 = vmatprep.subr.mxu0 0.0
    %118 = vmatpush1.msra.mxu0 %v79
    %119 = vmatprep.subr.mxu0 0.0
    %120 = vmatpush1.msra.mxu0 0.0
    %121 = vmatprep.subr.mxu0 0.0
    %122 = vmatpush1.msra.mxu0 0.0
    %123 = vmatprep.subr.mxu0 0.0
    %124 = vmatpush1.msra.mxu0 0.0
    %125 = vmatprep.subr.mxu0 0.0
    %126 = vmatpush1.msra.mxu0 0.0
    %127 = vmatprep.subr.mxu0 0.0
    %128 = vmatpush1.msra.mxu0 0.0
    %129 = vmatprep.subr.mxu0 0.0
    %130 = vmatpush1.msra.mxu0 0.0
    %131 = vmatprep.subr.mxu0 0.0
    %132 = vmatpush1.msra.mxu0 0.0
    %133 = vmatprep.subr.mxu0 0.0
    %134 = vmatpush1.msra.mxu0 0.0
    %135 = vmatprep.subr.mxu0 0.0
    %136 = vmatpush1.msra.mxu0 0.0
    %137 = vmatprep.subr.mxu0 0.0
    %138 = vmatpush1.msra.mxu0 0.0
    %139 = vmatprep.subr.mxu0 0.0
    %140 = vmatpush1.msra.mxu0 0.0
    %141 = vmatprep.subr.mxu0 0.0
    %142 = vmatpush1.msra.mxu0 0.0
    %143 = vmatprep.subr.mxu0 0.0
    %144 = vmatpush1.msra.mxu0 0.0
    %145 = vmatprep.subr.mxu0 0.0
    %146 = vmatpush1.msra.mxu0 0.0
    %147 = vmatprep.subr.mxu0 0.0
    %148 = vmatpush1.msra.mxu0 0.0
    %149 = vmatprep.subr.mxu0 0.0
    %150 = vmatpush1.msra.mxu0 0.0
    %151 = vmatprep.mubr.f32.mxu0 0.0
    %152 = vmatmul.mubr.f32.gmra.mrb[0].mxu0 %v62
    %v153 = vpop.f32.mrb[0].mxu0
    %v154 = vadd.f32 %v85, %v153
    %v155 = vpop.f32.mrb[0].mxu0
    %156 = vmatprep.mubr.f32.mxu0 0.0
    %157 = vmatmul.mubr.f32.gmra.mrb[0].mxu0 %v63
    %v158 = vpop.f32.mrb[0].mxu0
    %v159 = vadd.f32 %v85, %v158
    %v160 = vpop.f32.mrb[0].mxu0
    %161 = vdwg.mxu0
    %v162 = vmin.f32 %v154, 20.0
    %v163 = vmin.f32 %v159, 20.0
    %v164 = vmul.f32 %v162, 1.442695
    %v165 = vpow.pop %v164
    %v166 = vmul.f32 %v163, 1.442695
    %v167 = vpow.pop %v166
    %v168 = vadd.f32 %v165, 2.0
    %v169 = vadd.f32 %v167, 2.0
    %v170 = vmul.f32 %v165, %v168
    %v171 = vmul.f32 %v167, %v169
    %vm172 = vcmp.gt.f32.partialorder %v154, 20.0
    %vm173 = vcmp.gt.f32.partialorder %v159, 20.0
    %v174 = vadd.f32 %v170, 2.0
    %v175 = vadd.f32 %v171, 2.0
    %v176 = vrcp.pop %v174
    %v177 = vmul.f32 %v170, %v176
    %v178 = vrcp.pop %v175
    %v179 = vmul.f32 %v171, %v178
    %v180 = vmul.f32 %v154, %v177
    %v181 = vmul.f32 %v159, %v179
    %v182 = vsel %vm172, %v154, %v180
    %v183 = vsel %vm173, %v159, %v181
    %v184 = vld [vmem:[#allocation8] sm:$0xff]
    %v185 = vld [vmem:[#allocation8 + $0x8] sm:$0xff]
    %v186 = vld [vmem:[#allocation8 + $0x10] sm:$0xff]
    %v187 = vld [vmem:[#allocation8 + $0x18] sm:$0xff]
    %v188 = vld [vmem:[#allocation8 + $0x20] sm:$0xff]
    %v189 = vld [vmem:[#allocation8 + $0x28] sm:$0xff]
    %v190 = vld [vmem:[#allocation8 + $0x30] sm:$0xff]
    %v191 = vld [vmem:[#allocation8 + $0x38] sm:$0xff]
    %v192 = vld [vmem:[#allocation8 + $0x40] sm:$0xff]
    %v193 = vld [vmem:[#allocation8 + $0x48] sm:$0xff]
    %v194 = vld [vmem:[#allocation8 + $0x50] sm:$0xff]
    %v195 = vld [vmem:[#allocation8 + $0x58] sm:$0xff]
    %v196 = vld [vmem:[#allocation8 + $0x60] sm:$0xff]
    %v197 = vld [vmem:[#allocation8 + $0x68] sm:$0xff]
    %v198 = vld [vmem:[#allocation8 + $0x70] sm:$0xff]
    %v199 = vld [vmem:[#allocation8 + $0x78] sm:$0xff]
    %200 = vmatprep.subr.mxu0 0.0
    %201 = vmatpush1.msra.mxu0 %v184
    %202 = vmatprep.subr.mxu0 0.0
    %203 = vmatpush1.msra.mxu0 %v185
    %204 = vmatprep.subr.mxu0 0.0
    %205 = vmatpush1.msra.mxu0 %v186
    %206 = vmatprep.subr.mxu0 0.0
    %207 = vmatpush1.msra.mxu0 %v187
    %208 = vmatprep.subr.mxu0 0.0
    %209 = vmatpush1.msra.mxu0 %v188
    %210 = vmatprep.subr.mxu0 0.0
    %211 = vmatpush1.msra.mxu0 %v189
    %212 = vmatprep.subr.mxu0 0.0
    %213 = vmatpush1.msra.mxu0 %v190
    %214 = vmatprep.subr.mxu0 0.0
    %215 = vmatpush1.msra.mxu0 %v191
    %216 = vmatprep.subr.mxu0 0.0
    %217 = vmatpush1.msra.mxu0 %v192
    %218 = vmatprep.subr.mxu0 0.0
    %219 = vmatpush1.msra.mxu0 %v193
    %220 = vmatprep.subr.mxu0 0.0
    %221 = vmatpush1.msra.mxu0 %v194
    %222 = vmatprep.subr.mxu0 0.0
    %223 = vmatpush1.msra.mxu0 %v195
    %224 = vmatprep.subr.mxu0 0.0
    %225 = vmatpush1.msra.mxu0 %v196
    %226 = vmatprep.subr.mxu0 0.0
    %227 = vmatpush1.msra.mxu0 %v197
    %228 = vmatprep.subr.mxu0 0.0
    %229 = vmatpush1.msra.mxu0 %v198
    %230 = vmatprep.subr.mxu0 0.0
    %231 = vmatpush1.msra.mxu0 %v199
    %232 = vmatprep.subr.mxu0 0.0
    %233 = vmatpush1.msra.mxu0 0.0
    %234 = vmatprep.subr.mxu0 0.0
    %235 = vmatpush1.msra.mxu0 0.0
    %236 = vmatprep.subr.mxu0 0.0
    %237 = vmatpush1.msra.mxu0 0.0
    %238 = vmatprep.subr.mxu0 0.0
    %239 = vmatpush1.msra.mxu0 0.0
    %240 = vmatprep.subr.mxu0 0.0
    %241 = vmatpush1.msra.mxu0 0.0
    %242 = vmatprep.subr.mxu0 0.0
    %243 = vmatpush1.msra.mxu0 0.0
    %244 = vmatprep.subr.mxu0 0.0
    %245 = vmatpush1.msra.mxu0 0.0
    %246 = vmatprep.subr.mxu0 0.0
    %247 = vmatpush1.msra.mxu0 0.0
    %248 = vmatprep.subr.mxu0 0.0
    %249 = vmatpush1.msra.mxu0 0.0
    %250 = vmatprep.subr.mxu0 0.0
    %251 = vmatpush1.msra.mxu0 0.0
    %252 = vmatprep.subr.mxu0 0.0
    %253 = vmatpush1.msra.mxu0 0.0
    %254 = vmatprep.subr.mxu0 0.0
    %255 = vmatpush1.msra.mxu0 0.0
    %256 = vmatprep.subr.mxu0 0.0
    %257 = vmatpush1.msra.mxu0 0.0
    %258 = vmatprep.subr.mxu0 0.0
    %259 = vmatpush1.msra.mxu0 0.0
    %260 = vmatprep.subr.mxu0 0.0
    %261 = vmatpush1.msra.mxu0 0.0
    %262 = vmatprep.subr.mxu0 0.0
    %263 = vmatpush1.msra.mxu0 0.0
    %264 = vmatprep.mubr.f32.mxu0 0.0
    %265 = vmatmul.mubr.f32.gmra.mrb[0].mxu0 %v182
    %v266 = vpop.f32.mrb[0].mxu0
    %v267 = vadd.f32 0.0, %v266
    %v268 = vpop.f32.mrb[0].mxu0
    %269 = vmatprep.mubr.f32.mxu0 0.0
    %270 = vmatmul.mubr.f32.gmra.mrb[0].mxu0 %v183
    %v271 = vpop.f32.mrb[0].mxu0
    %v272 = vadd.f32 0.0, %v271
    %v273 = vpop.f32.mrb[0].mxu0
    %274 = vdwg.mxu0
    %p275 = scmp.eq.s32.totalorder 0, 0
    // Predicated region
    $region34: #{tpu_custom_call.1} parent=1 // pred_check
      %p276 = pneg %p275
    $region35: #{tpu_custom_call.1} parent=1 // pred_check_branch
      %278 = sbr.rel (%p276) target = $region37
    $region36: #{tpu_custom_call.1} parent=1 // pred_region
      %279 = vst [vmem:[#allocation2] sm:$0xff] %v267
      %280 = vst [vmem:[#allocation2 + $0x8] sm:$0xff] %v272
    $region37: #{tpu_custom_call.1} parent=1 // pred_fallthru
      _
    %p281 = scmp.gt.s32.totalorder 0, 0
    // Predicated region
    $region38: #{tpu_custom_call.1} parent=1 // pred_check
      %p282 = pneg %p281
    $region39: #{tpu_custom_call.1} parent=1 // pred_check_branch
      %284 = sbr.rel (%p282) target = $region41
    $region40: #{tpu_custom_call.1} parent=1 // pred_region
      %v285 = vld [vmem:[#allocation2] sm:$0xff]
      %v286 = vld [vmem:[#allocation2 + $0x8] sm:$0xff]
      %v287 = vadd.f32 %v285, %v267
      %v288 = vadd.f32 %v286, %v272
      %289 = vst [vmem:[#allocation2] sm:$0xff] %v287
      %290 = vst [vmem:[#allocation2 + $0x8] sm:$0xff] %v288
    $region41: #{tpu_custom_call.1} parent=1 // pred_fallthru
      _
    // Predicated region
    $region42: #{tpu_custom_call.1} parent=1 // pred_check
      %p291 = pneg %p275
    $region43: #{tpu_custom_call.1} parent=1 // pred_check_branch
      %293 = sbr.rel (%p291) target = $region45
    $region44: #{tpu_custom_call.1} parent=1 // pred_region
      %v294 = vld [vmem:[#allocation2] sm:$0xff]
      %v295 = vld [vmem:[#allocation2 + $0x8] sm:$0xff]
      %v296 = vld [vmem:[%s4] sm:$0x1]
      %v298 = vlaneseq
      %v299 = vshrl.u32 %v298, 7
      %v300 = vsub.s32 0, %v299
      %v301 = vrot.slane %v296, %v300
      %v303 = vadd.f32 %v294, %v301
      %v304 = vadd.f32 %v295, %v301
      %305 = vst [vmem:[#allocation9] sm:$0xff] %v303
      %306 = vst [vmem:[#allocation9 + $0x8] sm:$0xff] %v304
    $region45: #{tpu_custom_call.1} parent=1 // pred_fallthru
      _
    // Predicated region
    $region46: #{tpu_custom_call.1} parent=1 // pred_check
      _
    $region47: #{tpu_custom_call.1} parent=1 // pred_check_branch
      %308 = sbr.rel (0) target = $region49
    $region48: #{tpu_custom_call.1} parent=1 // pred_region
      %s310 = ssub.s32 256, 256
      %311 = vsyncadd [#allocation5], %s310
      %s312 = sshll.u32 [#allocation9], 4
      %s313 = int_to_ptr.vmem [resolvable:$true] %s312
      %318 = dma.vmem_to_hbm [thread:$0]  %s313, 256, %s5, [#allocation5], 128, 128, 8
    $region49: #{tpu_custom_call.1} parent=1 // pred_fallthru
      _
    // Predicated region
    $region50: #{tpu_custom_call.1} parent=1 // pred_check
      _
    $region51: #{tpu_custom_call.1} parent=1 // pred_check_branch
      %320 = sbr.rel (0) target = $region53
    $region52: #{tpu_custom_call.1} parent=1 // pred_region
      %321 = dma.done [#allocation5], 256
    $region53: #{tpu_custom_call.1} parent=1 // pred_fallthru
      _
    %322 = vsyncpa [#allocation4], 1
    %323 = vsyncpa [#allocation7], 1
    %324 = vsyncpa [#allocation5], 1

</llo_original>
